<compile_context>
chip_gen: v7x
topology: tpu7x:2x2x1
jax: 0.10.0
libtpu: 0.0.40
codegen_flags: <defaults>
</compile_context>

<pallas_src>
import functools

import jax
import jax.numpy as jnp
from jax.experimental import pallas as pl
from jax.experimental.pallas import tpu as pltpu

_TILE = 256   # row / contraction tile (MXU friendly; padded N is a multiple)
_LANE = 128   # lane width; fused epilogue outputs are padded to a multiple


# ----------------------------------------------------------------------------
# desc parsing (verbatim semantics from the PyTorch module)
# ----------------------------------------------------------------------------
def parse_desc(desc: str):
    assert '->' in desc
    in_desc, out_desc = desc.split('->')
    in_desc = [x.strip() for x in in_desc.split(',') if len(x.strip()) > 0]
    out_desc = [x.strip() for x in out_desc.split(',') if len(x.strip()) > 0]
    return (in_desc, out_desc)


# ----------------------------------------------------------------------------
# Generation-aware helpers
# ----------------------------------------------------------------------------
def _round_up(n, m):
    return ((n + m - 1) // m) * m


def _vmem_capacity_bytes():
    try:
        return int(getattr(pltpu.get_tpu_info(), "vmem_capacity_bytes",
                           128 * 1024 * 1024))
    except Exception:
        return 128 * 1024 * 1024


def _vmem_limit_bytes():
    cap = _vmem_capacity_bytes()
    # ~48 MiB on v7x (64 MiB physical VMEM), up to ~96 MiB on v5e/v6e (128 MiB).
    return min((cap * 3) // 4, 96 * 1024 * 1024)


def _xw_resident_budget_bytes():
    # Keep the resident XW small enough to leave room for double-buffered A
    # tiles, the f32 accumulator, weights and the output on every generation.
    cap = _vmem_capacity_bytes()
    return 16 * 1024 * 1024 if cap <= 64 * 1024 * 1024 else 48 * 1024 * 1024


def _is_v5e():
    try:
        kind = jax.devices()[0].device_kind.lower()
    except Exception:
        return False
    return ("v5 lite" in kind) or ("v5e" in kind) or ("v5litepod" in kind)


# ----------------------------------------------------------------------------
# Pallas kernels
# ----------------------------------------------------------------------------
def _xw_kernel(x_ref, w_ref, o_ref):
    # X block is loaded f32 and cast in-kernel (no wrapper-side cast pass);
    # W is bf16 and VMEM-resident.  f32 MXU accumulation.
    o_ref[...] = jnp.dot(x_ref[...].astype(jnp.bfloat16), w_ref[...],
                         preferred_element_type=jnp.float32).astype(o_ref.dtype)


def xw_pallas(x, w_bf16, *, out_dtype=jnp.bfloat16):
    """XW = X @ W computed once (prologue) so the propagation kernel never
    recomputes it per A_hat row tile."""
    n, c_in = x.shape
    h = w_bf16.shape[1]
    assert n % _TILE == 0, "pad N to a multiple of the tile before calling"
    tm = _TILE
    return pl.pallas_call(
        _xw_kernel,
        out_shape=jax.ShapeDtypeStruct((n, h), out_dtype),
        grid_spec=pltpu.PrefetchScalarGridSpec(
            num_scalar_prefetch=0,
            grid=(n // tm,),
            in_specs=[pl.BlockSpec((tm, c_in), lambda i: (i, 0)),
                      pl.BlockSpec((c_in, h), lambda i: (0, 0))],
            out_specs=pl.BlockSpec((tm, h), lambda i: (i, 0)),
        ),
        compiler_params=pltpu.CompilerParams(
            dimension_semantics=("parallel",),
            vmem_limit_bytes=_vmem_limit_bytes(),
        ),
        cost_estimate=pl.CostEstimate(
            flops=2 * n * c_in * h,
            transcendentals=0,
            bytes_accessed=4 * n * c_in + 2 * c_in * h + 2 * n * h,
        ),
    )(x, w_bf16)


def _gcn_kernel(mask_ref, a_ref, xw_ref, b_ref, wnext_ref, bnext_ref,
                o_ref, acc_ref, *, apply_relu, xw_resident, tk, nk):
    # out = [relu](A_hat @ XW + b) @ W_next + b_next     (lane-dense output)
    i = pl.program_id(0)
    k = pl.program_id(1)

    @pl.when(k == 0)
    def _init():
        acc_ref[...] = jnp.zeros_like(acc_ref)

    # Block sparsity: skip MXU work for all-zero A_hat blocks (scalar-prefetched
    # per-block mask lives in SMEM).
    @pl.when(mask_ref[i * nk + k] != 0)
    def _accumulate():
        if xw_resident:
            xw_blk = xw_ref[pl.ds(pl.multiple_of(k * tk, tk), tk), :]
        else:
            xw_blk = xw_ref[...]
        acc_ref[...] += jnp.dot(a_ref[...], xw_blk,
                                preferred_element_type=jnp.float32)

    @pl.when(k == nk - 1)
    def _finalize():
        h = acc_ref[...] + b_ref[...]
        if apply_relu:
            h = jnp.maximum(h, 0.0)
        # Fused "next matmul" epilogue (layer-2's X@W, or the padded Linear):
        # bf16 operands, f32 MXU accumulation, >=128-lane output store.
        out = jnp.dot(h.astype(jnp.bfloat16), wnext_ref[...],
                      preferred_element_type=jnp.float32) + bnext_ref[...]
        o_ref[...] = out.astype(o_ref.dtype)


def gcn_propagate_pallas(a_hat, xw, bias, blkmask, w_next, b_next, *,
                         apply_relu=True, out_dtype=jnp.float32):
    """Tiled (A_hat @ XW + b) with fused ReLU and a fused follow-on matmul.
    Grid = (row tiles [parallel], contraction tiles [arbitrary, last])."""
    n_pad = a_hat.shape[0]
    h = xw.shape[1]
    c_next = w_next.shape[1]
    assert a_hat.shape == (n_pad, n_pad) and n_pad % _TILE == 0
    assert c_next % _LANE == 0, "fused epilogue output must be lane-dense"
    tm = tk = _TILE
    nr, nk = n_pad // tm, n_pad // tk

    # Keep XW fully VMEM-resident when it fits the per-generation budget
    # (read from HBM once instead of once per row tile); otherwise stream it.
    xw_resident = (n_pad * h * xw.dtype.itemsize) <= _xw_resident_budget_bytes()

    a_spec_kwargs = {}
    if _is_v5e():
        # v5e: lowest HBM BW; deepen pipelining on the streamed A_hat blocks.
        a_spec_kwargs["pipeline_mode"] = pl.Buffered(3)
    a_spec = pl.BlockSpec((tm, tk), lambda i, k, m: (i, k), **a_spec_kwargs)

    if xw_resident:
        xw_spec = pl.BlockSpec((n_pad, h), lambda i, k, m: (0, 0))
    else:
        xw_spec = pl.BlockSpec((tk, h), lambda i, k, m: (k, 0))

    in_specs = [
        a_spec,                                              # A_hat tile
        xw_spec,                                             # XW (resident/stream)
        pl.BlockSpec((1, h), lambda i, k, m: (0, 0)),        # bias (resident)
        pl.BlockSpec((h, c_next), lambda i, k, m: (0, 0)),   # W_next (resident)
        pl.BlockSpec((1, c_next), lambda i, k, m: (0, 0)),   # b_next (resident)
    ]

    flops = 2 * n_pad * n_pad * h + 2 * n_pad * h * c_next
    bytes_accessed = (n_pad * n_pad * a_hat.dtype.itemsize
                      + (1 if xw_resident else nr) * n_pad * h * xw.dtype.itemsize
                      + h * c_next * w_next.dtype.itemsize
                      + n_pad * c_next * jnp.dtype(out_dtype).itemsize)

    return pl.pallas_call(
        functools.partial(_gcn_kernel, apply_relu=apply_relu,
                          xw_resident=xw_resident, tk=tk, nk=nk),
        out_shape=jax.ShapeDtypeStruct((n_pad, c_next), out_dtype),
        grid_spec=pltpu.PrefetchScalarGridSpec(
            num_scalar_prefetch=1,
            grid=(nr, nk),
            in_specs=in_specs,
            out_specs=pl.BlockSpec((tm, c_next), lambda i, k, m: (i, 0)),
            scratch_shapes=[pltpu.VMEM((tm, h), jnp.float32)],
        ),
        compiler_params=pltpu.CompilerParams(
            dimension_semantics=("parallel", "arbitrary"),
            vmem_limit_bytes=_vmem_limit_bytes(),
        ),
        cost_estimate=pl.CostEstimate(
            flops=flops, transcendentals=0, bytes_accessed=bytes_accessed),
    )(blkmask, a_hat, xw, bias, w_next, b_next)


# ----------------------------------------------------------------------------
# Parameter containers & graph glue (plain JAX)
# ----------------------------------------------------------------------------
def _glorot(key, shape):
    fan_in, fan_out = shape[0], shape[1]
    limit = jnp.sqrt(6.0 / (fan_in + fan_out))
    return jax.random.uniform(key, shape, jnp.float32, -limit, limit)


def _normalized_adjacency(edge_index, num_nodes):
    # A_hat = D^{-1/2} (A + I) D^{-1/2}, dense, A[dst, src] convention.
    # TODO(synk): the scatter/normalization stays in plain JAX (glue, O(N^2)).
    src, dst = edge_index[0], edge_index[1]
    a = jnp.zeros((num_nodes, num_nodes), jnp.float32)
    a = a.at[dst, src].set(1.0)
    a = a + jnp.eye(num_nodes, dtype=jnp.float32)
    deg = jnp.sum(a, axis=1)
    d_inv_sqrt = jnp.where(deg > 0, 1.0 / jnp.sqrt(deg), 0.0)
    return d_inv_sqrt[:, None] * a * d_inv_sqrt[None, :]


class GCNParams:
    def __init__(self, key, in_channels, out_channels):
        self.weight = _glorot(key, (in_channels, out_channels))  # (C_in, C_out)
        self.bias = jnp.zeros((1, out_channels), jnp.float32)


class LinearParams:
    def __init__(self, key, in_features, out_features):
        k_w, k_b = jax.random.split(key)
        limit = float(in_features) ** -0.5
        w = jax.random.uniform(k_w, (out_features, in_features), jnp.float32,
                               -limit, limit)                     # torch (out,in)
        self.weight_t = jnp.transpose(w)                          # (in, out)
        self.bias = jax.random.uniform(k_b, (1, out_features), jnp.float32,
                                       -limit, limit)
        self.out_features = out_features


# ----------------------------------------------------------------------------
# Modules chained by Sequential (glue in plain JAX, compute in Pallas)
# ----------------------------------------------------------------------------
class GCNNorm:
    """Builds the dense symmetric-normalized adjacency ONCE per forward, pads
    N up to a tile multiple (zero rows/cols, no ragged full-extent fallback),
    and emits the per-(row,k)-tile nonzero block mask used by the propagation
    kernels to skip empty A_hat blocks.  All routed as named variables."""

    def __call__(self, x, edge_index):
        n = x.shape[0]
        n_pad = _round_up(n, _TILE)
        a = _normalized_adjacency(edge_index, n)
        a = jnp.pad(a, ((0, n_pad - n), (0, n_pad - n)))
        nr = nk = n_pad // _TILE
        blk = a.reshape(nr, _TILE, nk, _TILE).sum(axis=(1, 3))
        blkmask = (blk > 0).astype(jnp.int32).reshape(-1)
        a_hat = a.astype(jnp.bfloat16)   # cast fuses into the D^-1/2 multiply
        x_pad = jnp.pad(x, ((0, n_pad - n), (0, 0)))
        return x_pad, a_hat, blkmask


class GCNReLUIntoNextXW:
    """relu(A_hat @ (X @ W1) + b1) @ W2 — layer-2's X@W is fused into
    layer-1's propagation epilogue, eliminating the second XW prologue kernel
    and its (N, hidden) HBM round trip.  Emits bf16 (it *is* layer-2's XW)."""

    def __init__(self, gcn: GCNParams, next_gcn: GCNParams):
        self.gcn = gcn
        self.w1_bf = gcn.weight.astype(jnp.bfloat16)
        self.w_next = next_gcn.weight.astype(jnp.bfloat16)          # (H, H)
        self.b_next = jnp.zeros((1, next_gcn.weight.shape[1]), jnp.float32)

    def __call__(self, x, a_hat, blkmask):
        xw = xw_pallas(x, self.w1_bf)                               # (N_pad, H) bf16
        return gcn_propagate_pallas(a_hat, xw, self.gcn.bias, blkmask,
                                    self.w_next, self.b_next,
                                    apply_relu=True, out_dtype=jnp.bfloat16)


class GCNReLULinear:
    """relu(A_hat @ XW2 + b2) @ W_lin + b_lin with W_lin zero-padded to a
    128-lane-dense slab inside the kernel; the wrapper slices [:, :out]."""

    def __init__(self, gcn: GCNParams, lin: LinearParams):
        self.gcn = gcn
        c_out = lin.out_features
        pad = _round_up(c_out, _LANE) - c_out
        self.w_lin = jnp.pad(lin.weight_t, ((0, 0), (0, pad))).astype(jnp.bfloat16)
        self.b_lin = jnp.pad(lin.bias, ((0, 0), (0, pad)))
        self.out_features = c_out

    def __call__(self, xw, a_hat, blkmask):
        out = gcn_propagate_pallas(a_hat, xw, self.gcn.bias, blkmask,
                                   self.w_lin, self.b_lin,
                                   apply_relu=True, out_dtype=jnp.float32)
        return out[:, :self.out_features]       # lane slice (wrapper glue)


# ----------------------------------------------------------------------------
# Sequential container (faithful port of the PyTorch forward-pass semantics)
# ----------------------------------------------------------------------------
class Sequential:
    def __init__(self, args: str, modules):
        self.args = [x.strip() for x in args.split(',') if len(x.strip()) > 0]
        assert len(modules) > 0
        assert isinstance(modules[0], (tuple, list))
        self.fns, self.descs = [], []
        for i, module in enumerate(modules):
            if isinstance(module, (tuple, list)) and len(module) >= 2:
                assert len(module) == 2
                module, desc = module
                in_desc, out_desc = parse_desc(desc)
            elif isinstance(module, (tuple, list)):
                module = module[0]
                in_desc = out_desc = self.descs[i - 1][1]
            else:
                in_desc = out_desc = self.descs[i - 1][1]
            self.fns.append(module)
            self.descs.append((in_desc, out_desc))

    def __call__(self, *args):
        if len(args) == 1 and len(self.args) > 1:
            args = args[0]
        specified_args = self.args[:]
        missing_args = []
        while len(args) < len(specified_args) and specified_args[-1][-1] == '?':
            missing_args.append(specified_args[-1][:-1])
            specified_args = specified_args[:-1]
        specified_args = [arg.strip('?') for arg in specified_args]
        assert len(args) == len(specified_args)
        state = {key: arg for key, arg in zip(specified_args, args)}
        state['self'] = self
        out = None
        for fn, (in_desc, out_desc) in zip(self.fns, self.descs):
            out = fn(*[state[key] for key in in_desc if key not in missing_args])
            out = (out,) if not isinstance(out, tuple) else out
            assert len(out) == len(out_desc)
            state.update({key: item for key, item in zip(out_desc, out)})
        return out[0] if len(out) == 1 else out


# ----------------------------------------------------------------------------
# Pure-JAX reference (unfused GCN -> ReLU -> GCN -> ReLU -> Linear, f32)
# ----------------------------------------------------------------------------
def reference_forward(x, edge_index, w1, b1, w2, b2, wlin_t, blin):
    a = _normalized_adjacency(edge_index, x.shape[0])
    h = jnp.maximum(a @ (x @ w1) + b1, 0.0)
    h = jnp.maximum(a @ (h @ w2) + b2, 0.0)
    return h @ wlin_t + blin


# ----------------------------------------------------------------------------
# Main
# ----------------------------------------------------------------------------
if __name__ == "__main__":
    key = jax.random.PRNGKey(0)
    k_x, k_g1, k_g2, k_lin = jax.random.split(key, 4)

    num_nodes = 512        # pads to 2 row tiles x 2 contraction tiles of 256
    in_channels = 128      # lane-friendly feature dims
    hidden = 128
    out_channels = 8       # lane-padded to 128 inside the final kernel

    # Node features (N, C_in)
    x = jax.random.normal(k_x, (num_nodes, in_channels), jnp.float32)

    # Ring graph, bidirectional edges: edge_index (2, E) int32
    idx = jnp.arange(num_nodes, dtype=jnp.int32)
    nxt = (idx + 1) % num_nodes
    src = jnp.concatenate([idx, nxt])
    dst = jnp.concatenate([nxt, idx])
    edge_index = jnp.stack([src, dst], axis=0)

    gcn1 = GCNParams(k_g1, in_channels, hidden)
    gcn2 = GCNParams(k_g2, hidden, hidden)
    lin = LinearParams(k_lin, hidden, out_channels)

    layer1 = GCNReLUIntoNextXW(gcn1, gcn2)
    layer2 = GCNReLULinear(gcn2, lin)

    # Mathematically identical to the docstring example
    #   Sequential('x, edge_index', [
    #       (GCNConv(in, hidden), 'x, edge_index -> x'), ReLU(),
    #       (GCNConv(hidden, hidden), 'x, edge_index -> x'), ReLU(),
    #       Linear(hidden, out)])
    # with ReLU / layer-2's X@W / the final Linear fused into the propagation
    # kernel epilogues, and A_hat (+ block mask) built once and routed as
    # named Sequential variables.
    model = Sequential('x, edge_index', [
        (GCNNorm(), 'x, edge_index -> x, a_hat, blkmask'),
        (layer1, 'x, a_hat, blkmask -> xw2'),
        (layer2, 'xw2, a_hat, blkmask -> x'),
        (lambda y: y[:num_nodes], 'x -> x'),       # drop padding rows
    ])

    out = model(x, edge_index)
    out = jax.block_until_ready(out)
    assert out.shape == (num_nodes, out_channels), out.shape
    assert bool(jnp.all(jnp.isfinite(out)))

    # Numerical check against the unfused f32 reference (bf16 operands in the
    # kernels -> allow ~1% relative error).
    ref = reference_forward(x, edge_index, gcn1.weight, gcn1.bias,
                            gcn2.weight, gcn2.bias, lin.weight_t, lin.bias)
    rel_err = jnp.linalg.norm(out - ref) / (jnp.linalg.norm(ref) + 1e-6)
    assert float(rel_err) < 3e-2, float(rel_err)

    print("KERNEL_OK")
</pallas_src>

<mosaic_0001>
module attributes {stable_mosaic.version = 11 : i64} {
  func.func @_xw_kernel(%arg0: i32, %arg1: memref<256x128xf32, #tpu.memory_space<vmem>>, %arg2: memref<128x128xbf16, #tpu.memory_space<vmem>>, %arg3: memref<256x128xbf16, #tpu.memory_space<vmem>>) attributes {dimension_semantics = [#tpu.dimension_semantics<parallel>], iteration_bounds = array<i64: 2>, scalar_prefetch = 0 : i64, scratch_operands = 0 : i64, tpu.core_type = #tpu.core_type<tc>, window_params = [{transform_indices = @transform_0, window_bounds = array<i64: 256, 128>}, {pipeline_mode = #tpu.pipeline_mode<synchronous>, transform_indices = @transform_1, window_bounds = array<i64: 128, 128>}, {transform_indices = @transform_2, window_bounds = array<i64: 256, 128>}]} {
    %c0 = arith.constant 0 : index
    %c0_0 = arith.constant 0 : index
    %0 = vector.load %arg1[%c0, %c0_0] : memref<256x128xf32, #tpu.memory_space<vmem>>, vector<256x128xf32>
    %1 = arith.truncf %0 : vector<256x128xf32> to vector<256x128xbf16>
    %c0_1 = arith.constant 0 : index
    %c0_2 = arith.constant 0 : index
    %2 = vector.load %arg2[%c0_1, %c0_2] : memref<128x128xbf16, #tpu.memory_space<vmem>>, vector<128x128xbf16>
    %cst = arith.constant dense<0.000000e+00> : vector<256x128xf32>
    %3 = tpu.matmul %1, %2, %cst {dimension_numbers = #tpu.dot_dimension_numbers<[1], [0], [0], [1], [0, 0, 1, 1], [], []>} : vector<256x128xbf16>, vector<128x128xbf16>, vector<256x128xf32> -> vector<256x128xf32>
    %4 = arith.truncf %3 : vector<256x128xf32> to vector<256x128xbf16>
    %c0_3 = arith.constant 0 : index
    %c0_4 = arith.constant 0 : index
    %5 = vector.load %arg3[%c0_3, %c0_4] : memref<256x128xbf16, #tpu.memory_space<vmem>>, vector<256x128xbf16>
    tpu.vector_store %arg3[%c0_3, %c0_4], %4 {strides = array<i32>} : memref<256x128xbf16, #tpu.memory_space<vmem>>, vector<256x128xbf16>,
    return
  }
  func.func @transform_0(%arg0: i32) -> (i32, i32) {
    %c0_i32 = arith.constant 0 : i32
    %c0_i32_0 = arith.constant 0 : i32
    return %arg0, %c0_i32 : i32, i32
  }
  func.func @transform_1(%arg0: i32) -> (i32, i32) {
    %c0_i32 = arith.constant 0 : i32
    %c0_i32_0 = arith.constant 0 : i32
    %c0_i32_1 = arith.constant 0 : i32
    return %c0_i32, %c0_i32_0 : i32, i32
  }
  func.func @transform_2(%arg0: i32) -> (i32, i32) {
    %c0_i32 = arith.constant 0 : i32
    %c0_i32_0 = arith.constant 0 : i32
    return %arg0, %c0_i32 : i32, i32
  }
}

</mosaic_0001>

<llo_original>
// kernel: tpu_custom_call.1
$region0: #{tpu_custom_call.1}
  #allocation0 [shape = 'u32[]', space=smem, size = 0x4, offset = 0x4, fixed_abs, tag = 'smem constant byte address 0x4 - core index']
  #allocation1 [shape = 'u32[144,128]{1,0:T(1,128)}', space=vmem, size = 0x12000, scoped, tag = 'internal scratch']
  %s0 = inlined_call_operand.hbm [shape: f32[512,128], index: 0, kind: input, shape index: {}]
  %s1 = inlined_call_operand.hbm [shape: bf16[128,128], index: 1, kind: input, shape index: {}]
  %s2 = inlined_call_operand.hbm [shape: bf16[512,128], index: 2, kind: output, shape index: {}]
  %s3 = sld [smem:[#allocation0]]
  $region49: #{tpu_custom_call.1} parent=0
    _
  %s5 = ssub.s32 1, %s3
  %s6 = scalar_select 0, %s5, %s3
  $region1: #{tpu_custom_call.1} parent=0
    #allocation2 [shape = 'u8[262144]{0}', space=vmem, size = 0x40000, scoped, tag = 'input window, operand 0']
    #allocation3 [shape = 's32[2]{0}', space=sflag, size = 0x8, scoped, tag = 'scoped memory for tpu_custom_call.1']
    #allocation4 [shape = 's32[2]{0}', space=sflag, size = 0x8, scoped, tag = 'scoped memory for tpu_custom_call.1']
    #allocation5 [shape = 'u8[32768]{0}', space=vmem, size = 0x8000, scoped, tag = 'input window, operand 1, single buffered']
    #allocation6 [shape = 's32[1]{0}', space=sflag, size = 0x4, scoped, tag = 'scoped memory for tpu_custom_call.1']
    #allocation7 [shape = 'u8[131072]{0}', space=vmem, size = 0x20000, scoped, tag = 'output window, operand 0']
    %7 = vsyncpa [#allocation3], 0
    %s8 = scalar_lea.sflag [#allocation3], 1
    %9 = vsyncpa %s8, 0
    %10 = vsyncpa [#allocation6], 0
    %11 = vsyncpa [#allocation4], 0
    %s12 = scalar_lea.sflag [#allocation4], 1
    %13 = vsyncpa %s12, 0
    loop: start=0, step=1, limit=4
    $region2: #{tpu_custom_call.1} parent=1 // loop_pre_header
      _
    $region3: #{tpu_custom_call.1} parent=1 // loop_header
      %s15 = sphi 0, %s19
      %p16 = scmp.ge.s32.totalorder %s15, 4
      %s25 = sphi 0, %s27
      %s28 = sphi 0, %s25
      %s29 = sphi 0, %s28
      %s45 = sphi 0, %s29
      %s49 = sphi 0, %s49
      %s51 = sphi 0, %s49
      %s52 = sphi 0, %s51
      %s66 = sphi 0, %s52
      %s72 = sphi 0, %s74
      %s75 = sphi 0, %s72
      %s76 = sphi 0, %s75
      %s92 = sphi 0, %s76
    $region4: #{tpu_custom_call.1} parent=1 // loop_header_branch
      %18 = sbr.rel (%p16) target = $region8
    $region5: #{tpu_custom_call.1} parent=1 // loop_body
      %s20 = ssub.s32 %s15, 1
      %s21 = ssub.s32 %s15, 2
      %s22 = sadd.s32 %s15, 1
      %s23 = ssub.s32 %s15, %s22
      %p24 = scmp.eq.s32.totalorder %s23, 0
      %s26 = sadd.s32 %s25, 1
      %s27 = scalar_select %p24, %s25, %s26
      %p30 = pneg %p24
      %p31 = scmp.eq.s32.totalorder %s15, 1
      %p32 = por %p30, %p31
      %p33 = scmp.ne.s32.totalorder %s25, %s28
      %p34 = scmp.eq.s32.totalorder %s15, 0
      %p35 = por %p33, %p34
      %p36 = scmp.ne.s32.totalorder %s25, %s28
      %p37 = scmp.eq.s32.totalorder %s20, 1
      %p38 = por %p36, %p37
      %p39 = scmp.ne.s32.totalorder %s28, %s29
      %p40 = scmp.eq.s32.totalorder %s20, 0
      %p41 = por %p39, %p40
      %p42 = scmp.ne.s32.totalorder %s28, %s29
      %p43 = scmp.eq.s32.totalorder %s21, 1
      %p44 = por %p42, %p43
      %p46 = scmp.ne.s32.totalorder %s29, %s45
      %p47 = scmp.eq.s32.totalorder %s21, 0
      %p48 = por %p46, %p47
      %s50 = sadd.s32 %s49, 1
      %p53 = scmp.eq.s32.totalorder %s15, 1
      %p54 = scmp.ne.s32.totalorder %s49, %s51
      %p55 = scmp.eq.s32.totalorder %s15, 0
      %p56 = por %p54, %p55
      %p57 = scmp.ne.s32.totalorder %s49, %s51
      %p58 = scmp.eq.s32.totalorder %s20, 1
      %p59 = por %p57, %p58
      %p60 = scmp.ne.s32.totalorder %s51, %s52
      %p61 = scmp.eq.s32.totalorder %s20, 0
      %p62 = por %p60, %p61
      %p63 = scmp.ne.s32.totalorder %s51, %s52
      %p64 = scmp.eq.s32.totalorder %s21, 1
      %p65 = por %p63, %p64
      %p67 = scmp.ne.s32.totalorder %s52, %s66
      %p68 = scmp.eq.s32.totalorder %s21, 0
      %p69 = por %p67, %p68
      %s70 = ssub.s32 %s15, %s22
      %p71 = scmp.eq.s32.totalorder %s70, 0
      %s73 = sadd.s32 %s72, 1
      %s74 = scalar_select %p71, %s72, %s73
      %p77 = pneg %p71
      %p78 = scmp.eq.s32.totalorder %s15, 1
      %p79 = por %p77, %p78
      %p80 = scmp.ne.s32.totalorder %s72, %s75
      %p81 = scmp.eq.s32.totalorder %s15, 0
      %p82 = por %p80, %p81
      %p83 = scmp.ne.s32.totalorder %s72, %s75
      %p84 = scmp.eq.s32.totalorder %s20, 1
      %p85 = por %p83, %p84
      %p86 = scmp.ne.s32.totalorder %s75, %s76
      %p87 = scmp.eq.s32.totalorder %s20, 0
      %p88 = por %p86, %p87
      %p89 = scmp.ne.s32.totalorder %s75, %s76
      %p90 = scmp.eq.s32.totalorder %s21, 1
      %p91 = por %p89, %p90
      %p93 = scmp.ne.s32.totalorder %s76, %s92
      %p94 = scmp.eq.s32.totalorder %s21, 0
      %p95 = por %p93, %p94
      %p96 = scmp.le.s32.totalorder 1, %s15
      %p97 = scmp.lt.s32.totalorder %s15, 3
      %p98 = pnand %p96, %p97
      %p99 = pneg %p98
      // Predicated region
      $region9: #{tpu_custom_call.1} parent=5 // pred_check
        _
      $region10: #{tpu_custom_call.1} parent=5 // pred_check_branch
        %101 = sbr.rel (%p98) target = $region12
      $region11: #{tpu_custom_call.1} parent=5 // pred_region
        %s102 = ssub.s32 %s15, 1
        // Predicated region
        $region13: #{tpu_custom_call.1} parent=11 // pred_check
          %p103 = pneg %p62
        $region14: #{tpu_custom_call.1} parent=11 // pred_check_branch
          %105 = sbr.rel (%p103) target = $region16
        $region15: #{tpu_custom_call.1} parent=11 // pred_region
          %s107 = ssub.s32 1024, 1024
          %108 = vsyncadd [#allocation6], %s107
          %s109 = sshll.u32 [#allocation5], 4
          %s110 = int_to_ptr.vmem [resolvable:$true] %s109
          %115 = dma.hbm_to_vmem [thread:$0]  %s1, 1024, %s110, [#allocation6], 64, 64, 4
        $region16: #{tpu_custom_call.1} parent=11 // pred_fallthru
          _
      $region12: #{tpu_custom_call.1} parent=5 // pred_fallthru
        _
      %p116 = scmp.lt.s32.totalorder %s15, 2
      // Predicated region
      $region17: #{tpu_custom_call.1} parent=5 // pred_check
        %p117 = pneg %p116
      $region18: #{tpu_custom_call.1} parent=5 // pred_check_branch
        %119 = sbr.rel (%p117) target = $region20
      $region19: #{tpu_custom_call.1} parent=5 // pred_region
        // Predicated region
        $region21: #{tpu_custom_call.1} parent=19 // pred_check
          %p120 = pneg %p35
        $region22: #{tpu_custom_call.1} parent=19 // pred_check_branch
          %122 = sbr.rel (%p120) target = $region24
        $region23: #{tpu_custom_call.1} parent=19 // pred_region
          %s123 = sand.u32 %s25, 1
          %s124 = scalar_lea.sflag [#allocation3], %s123
          %s125 = sand.u32 %s25, 1
          %s126 = smul.addr %s125, 256
          %s127 = scalar_lea.vmem [#allocation2], %s126
          %s128 = smul.u32 32, %s15
          %s130 = ssub.s32 4096, 4096
          %131 = vsyncadd %s124, %s130
          %s132 = smul.addr %s128, 128
          %s133 = scalar_lea.hbm %s0, %s132
          %s134 = sshll.u32 %s127, 4
          %s135 = int_to_ptr.vmem [resolvable:$true] %s134
          %140 = dma.hbm_to_vmem [thread:$0]  %s133, 4096, %s135, %s124, 128, 128, 8
        $region24: #{tpu_custom_call.1} parent=19 // pred_fallthru
          _
      $region20: #{tpu_custom_call.1} parent=5 // pred_fallthru
        _
      %p141 = scmp.le.s32.totalorder 1, %s15
      %p142 = scmp.lt.s32.totalorder %s15, 3
      %p143 = pnand %p141, %p142
      %p144 = pneg %p143
      // Predicated region
      $region25: #{tpu_custom_call.1} parent=5 // pred_check
        _
      $region26: #{tpu_custom_call.1} parent=5 // pred_check_branch
        %146 = sbr.rel (%p143) target = $region28
      $region27: #{tpu_custom_call.1} parent=5 // pred_region
        %s147 = ssub.s32 %s15, 1
        %s148 = sand.u32 %s28, 1
        %s149 = scalar_lea.sflag [#allocation3], %s148
        %s150 = sand.u32 %s28, 1
        %s151 = smul.addr %s150, 256
        %s152 = scalar_lea.vmem [#allocation2], %s151
        // Predicated region
        $region29: #{tpu_custom_call.1} parent=27 // pred_check
          %p153 = pneg %p41
        $region30: #{tpu_custom_call.1} parent=27 // pred_check_branch
          %155 = sbr.rel (%p153) target = $region32
        $region31: #{tpu_custom_call.1} parent=27 // pred_region
          %156 = dma.done %s149, 4096
        $region32: #{tpu_custom_call.1} parent=27 // pred_fallthru
          _
        // Predicated region
        $region33: #{tpu_custom_call.1} parent=27 // pred_check
          %p157 = pneg %p62
        $region34: #{tpu_custom_call.1} parent=27 // pred_check_branch
          %159 = sbr.rel (%p157) target = $region36
        $region35: #{tpu_custom_call.1} parent=27 // pred_region
          %160 = dma.done [#allocation6], 1024
        $region36: #{tpu_custom_call.1} parent=27 // pred_fallthru
          _
        %s161 = sand.u32 %s28, 1
        %s162 = scalar_lea.sflag [#allocation3], %s161
        %s163 = sand.u32 %s28, 1
        %s164 = smul.addr %s163, 256
        %s165 = scalar_lea.vmem [#allocation2], %s164
        %p166 = pneg %p41
        %p167 = pneg %p38
        %p168 = pneg %p62
        %p169 = pneg %p59
        %p170 = pneg %p88
        %p171 = pneg %p85
        %s172 = sand.u32 %s75, 1
        %s173 = scalar_lea.sflag [#allocation4], %s172
        %s174 = sand.u32 %s75, 1
        %s175 = smul.addr %s174, 128
        %s176 = scalar_lea.vmem [#allocation7], %s175
        %s177 = smul.u32 32, %s20
        %s178 = smul.u32 32, %s20
        %v180 = vld [vmem:[%s152] sm:$0xff]
        %v181 = vld [vmem:[%s152 + $0x8] sm:$0xff]
        %v182 = vld [vmem:[%s152 + $0x10] sm:$0xff]
        %v183 = vld [vmem:[%s152 + $0x18] sm:$0xff]
        %v184 = vld [vmem:[%s152 + $0x20] sm:$0xff]
        %v185 = vld [vmem:[%s152 + $0x28] sm:$0xff]
        %v186 = vld [vmem:[%s152 + $0x30] sm:$0xff]
        %v187 = vld [vmem:[%s152 + $0x38] sm:$0xff]
        %v188 = vld [vmem:[%s152 + $0x40] sm:$0xff]
        %v189 = vld [vmem:[%s152 + $0x48] sm:$0xff]
        %v190 = vld [vmem:[%s152 + $0x50] sm:$0xff]
        %v191 = vld [vmem:[%s152 + $0x58] sm:$0xff]
        %v192 = vld [vmem:[%s152 + $0x60] sm:$0xff]
        %v193 = vld [vmem:[%s152 + $0x68] sm:$0xff]
        %v194 = vld [vmem:[%s152 + $0x70] sm:$0xff]
        %v195 = vld [vmem:[%s152 + $0x78] sm:$0xff]
        %v196 = vld [vmem:[%s152 + $0x80] sm:$0xff]
        %v197 = vld [vmem:[%s152 + $0x88] sm:$0xff]
        %v198 = vld [vmem:[%s152 + $0x90] sm:$0xff]
        %v199 = vld [vmem:[%s152 + $0x98] sm:$0xff]
        %v200 = vld [vmem:[%s152 + $0xa0] sm:$0xff]
        %v201 = vld [vmem:[%s152 + $0xa8] sm:$0xff]
        %v202 = vld [vmem:[%s152 + $0xb0] sm:$0xff]
        %v203 = vld [vmem:[%s152 + $0xb8] sm:$0xff]
        %v204 = vld [vmem:[%s152 + $0xc0] sm:$0xff]
        %v205 = vld [vmem:[%s152 + $0xc8] sm:$0xff]
        %v206 = vld [vmem:[%s152 + $0xd0] sm:$0xff]
        %v207 = vld [vmem:[%s152 + $0xd8] sm:$0xff]
        %v208 = vld [vmem:[%s152 + $0xe0] sm:$0xff]
        %v209 = vld [vmem:[%s152 + $0xe8] sm:$0xff]
        %v210 = vld [vmem:[%s152 + $0xf0] sm:$0xff]
        %v211 = vld [vmem:[%s152 + $0xf8] sm:$0xff]
        %v212 = vpack.c.bf16 %v181, %v180
        %v213 = vpack.c.bf16 %v183, %v182
        %v214 = vpack.c.bf16 %v185, %v184
        %v215 = vpack.c.bf16 %v187, %v186
        %v216 = vpack.c.bf16 %v189, %v188
        %v217 = vpack.c.bf16 %v191, %v190
        %v218 = vpack.c.bf16 %v193, %v192
        %v219 = vpack.c.bf16 %v195, %v194
        %v220 = vpack.c.bf16 %v197, %v196
        %v221 = vpack.c.bf16 %v199, %v198
        %v222 = vpack.c.bf16 %v201, %v200
        %v223 = vpack.c.bf16 %v203, %v202
        %v224 = vpack.c.bf16 %v205, %v204
        %v225 = vpack.c.bf16 %v207, %v206
        %v226 = vpack.c.bf16 %v209, %v208
        %v227 = vpack.c.bf16 %v211, %v210
        %v228 = vld [vmem:[#allocation5] sm:$0xf]
        %v229 = vld [vmem:[#allocation5 + $0x4] sm:$0xf]
        %v230 = vld [vmem:[#allocation5 + $0x8] sm:$0xf]
        %v231 = vld [vmem:[#allocation5 + $0xc] sm:$0xf]
        %v232 = vld [vmem:[#allocation5 + $0x10] sm:$0xf]
        %v233 = vld [vmem:[#allocation5 + $0x14] sm:$0xf]
        %v234 = vld [vmem:[#allocation5 + $0x18] sm:$0xf]
        %v235 = vld [vmem:[#allocation5 + $0x1c] sm:$0xf]
        %v236 = vld [vmem:[#allocation5 + $0x20] sm:$0xf]
        %v237 = vld [vmem:[#allocation5 + $0x24] sm:$0xf]
        %v238 = vld [vmem:[#allocation5 + $0x28] sm:$0xf]
        %v239 = vld [vmem:[#allocation5 + $0x2c] sm:$0xf]
        %v240 = vld [vmem:[#allocation5 + $0x30] sm:$0xf]
        %v241 = vld [vmem:[#allocation5 + $0x34] sm:$0xf]
        %v242 = vld [vmem:[#allocation5 + $0x38] sm:$0xf]
        %v243 = vld [vmem:[#allocation5 + $0x3c] sm:$0xf]
        %v260 = vunpack.c.l.b16 %v228
        %v261 = vunpack.c.l.b16 %v229
        %v262 = vunpack.c.l.b16 %v230
        %v263 = vunpack.c.l.b16 %v231
        %v264 = vunpack.c.l.b16 %v232
        %v265 = vunpack.c.l.b16 %v233
        %v266 = vunpack.c.l.b16 %v234
        %v267 = vunpack.c.l.b16 %v235
        %v268 = vunpack.c.l.b16 %v236
        %v269 = vunpack.c.l.b16 %v237
        %v270 = vunpack.c.l.b16 %v238
        %v271 = vunpack.c.l.b16 %v239
        %v272 = vunpack.c.l.b16 %v240
        %v273 = vunpack.c.l.b16 %v241
        %v274 = vunpack.c.l.b16 %v242
        %v275 = vunpack.c.l.b16 %v243
        %v276 = vpack.c.b16 %v261, %v260
        %v277 = vpack.c.b16 %v263, %v262
        %v278 = vpack.c.b16 %v265, %v264
        %v279 = vpack.c.b16 %v267, %v266
        %v280 = vpack.c.b16 %v269, %v268
        %v281 = vpack.c.b16 %v271, %v270
        %v282 = vpack.c.b16 %v273, %v272
        %v283 = vpack.c.b16 %v275, %v274
        %292 = vmatprep.subr.bf16.mxu0 0
        %293 = vmatpush1.bf16.msra.mxu0 %v276
        %294 = vmatprep.subr.bf16.mxu0 0
        %295 = vmatpush1.bf16.msra.mxu0 %v277
        %296 = vmatprep.subr.bf16.mxu0 0
        %297 = vmatpush1.bf16.msra.mxu0 %v278
        %298 = vmatprep.subr.bf16.mxu0 0
        %299 = vmatpush1.bf16.msra.mxu0 %v279
        %300 = vmatprep.subr.bf16.mxu0 0
        %301 = vmatpush1.bf16.msra.mxu0 %v280
        %302 = vmatprep.subr.bf16.mxu0 0
        %303 = vmatpush1.bf16.msra.mxu0 %v281
        %304 = vmatprep.subr.bf16.mxu0 0
        %305 = vmatpush1.bf16.msra.mxu0 %v282
        %306 = vmatprep.subr.bf16.mxu0 0
        %307 = vmatpush1.bf16.msra.mxu0 %v283
        %308 = vmatprep.subr.bf16.mxu0 0
        %309 = vmatpush1.bf16.msra.mxu0 0
        %310 = vmatprep.subr.bf16.mxu0 0
        %311 = vmatpush1.bf16.msra.mxu0 0
        %312 = vmatprep.subr.bf16.mxu0 0
        %313 = vmatpush1.bf16.msra.mxu0 0
        %314 = vmatprep.subr.bf16.mxu0 0
        %315 = vmatpush1.bf16.msra.mxu0 0
        %316 = vmatprep.subr.bf16.mxu0 0
        %317 = vmatpush1.bf16.msra.mxu0 0
        %318 = vmatprep.subr.bf16.mxu0 0
        %319 = vmatpush1.bf16.msra.mxu0 0
        %320 = vmatprep.subr.bf16.mxu0 0
        %321 = vmatpush1.bf16.msra.mxu0 0
        %322 = vmatprep.subr.bf16.mxu0 0
        %323 = vmatpush1.bf16.msra.mxu0 0
        %324 = vmatprep.mubr.bf16.mxu0 0
        %325 = vmatmul.mubr.bf16.gmra.mrb[0].mxu0 %v212
        %v326 = vpop.f32.mrb[0].mxu0
        %v327 = vadd.f32 0.0, %v326
        %v328 = vpop.f32.mrb[0].mxu0
        %v329 = vpop.f32.mrb[0].mxu0
        %v330 = vadd.f32 0.0, %v329
        %v331 = vpop.f32.mrb[0].mxu0
        %332 = vmatprep.mubr.bf16.mxu0 0
        %333 = vmatmul.mubr.bf16.gmra.mrb[0].mxu0 %v213
        %v334 = vpop.f32.mrb[0].mxu0
        %v335 = vadd.f32 0.0, %v334
        %v336 = vpop.f32.mrb[0].mxu0
        %v337 = vpop.f32.mrb[0].mxu0
        %v338 = vadd.f32 0.0, %v337
        %v339 = vpop.f32.mrb[0].mxu0
        %340 = vmatprep.mubr.bf16.mxu0 0
        %341 = vmatmul.mubr.bf16.gmra.mrb[0].mxu0 %v214
        %v342 = vpop.f32.mrb[0].mxu0
        %v343 = vadd.f32 0.0, %v342
        %v344 = vpop.f32.mrb[0].mxu0
        %v345 = vpop.f32.mrb[0].mxu0
        %v346 = vadd.f32 0.0, %v345
        %v347 = vpop.f32.mrb[0].mxu0
        %348 = vmatprep.mubr.bf16.mxu0 0
        %349 = vmatmul.mubr.bf16.gmra.mrb[0].mxu0 %v215
        %v350 = vpop.f32.mrb[0].mxu0
        %v351 = vadd.f32 0.0, %v350
        %v352 = vpop.f32.mrb[0].mxu0
        %v353 = vpop.f32.mrb[0].mxu0
        %v354 = vadd.f32 0.0, %v353
        %v355 = vpop.f32.mrb[0].mxu0
        %356 = vmatprep.mubr.bf16.mxu0 0
        %357 = vmatmul.mubr.bf16.gmra.mrb[0].mxu0 %v216
        %v358 = vpop.f32.mrb[0].mxu0
        %v359 = vadd.f32 0.0, %v358
        %v360 = vpop.f32.mrb[0].mxu0
        %v361 = vpop.f32.mrb[0].mxu0
        %v362 = vadd.f32 0.0, %v361
        %v363 = vpop.f32.mrb[0].mxu0
        %364 = vmatprep.mubr.bf16.mxu0 0
        %365 = vmatmul.mubr.bf16.gmra.mrb[0].mxu0 %v217
        %v366 = vpop.f32.mrb[0].mxu0
        %v367 = vadd.f32 0.0, %v366
        %v368 = vpop.f32.mrb[0].mxu0
        %v369 = vpop.f32.mrb[0].mxu0
        %v370 = vadd.f32 0.0, %v369
        %v371 = vpop.f32.mrb[0].mxu0
        %372 = vmatprep.mubr.bf16.mxu0 0
        %373 = vmatmul.mubr.bf16.gmra.mrb[0].mxu0 %v218
        %v374 = vpop.f32.mrb[0].mxu0
        %v375 = vadd.f32 0.0, %v374
        %v376 = vpop.f32.mrb[0].mxu0
        %v377 = vpop.f32.mrb[0].mxu0
        %v378 = vadd.f32 0.0, %v377
        %v379 = vpop.f32.mrb[0].mxu0
        %380 = vmatprep.mubr.bf16.mxu0 0
        %381 = vmatmul.mubr.bf16.gmra.mrb[0].mxu0 %v219
        %v382 = vpop.f32.mrb[0].mxu0
        %v383 = vadd.f32 0.0, %v382
        %v384 = vpop.f32.mrb[0].mxu0
        %v385 = vpop.f32.mrb[0].mxu0
        %v386 = vadd.f32 0.0, %v385
        %v387 = vpop.f32.mrb[0].mxu0
        %388 = vmatprep.mubr.bf16.mxu0 0
        %389 = vmatmul.mubr.bf16.gmra.mrb[0].mxu0 %v220
        %v390 = vpop.f32.mrb[0].mxu0
        %v391 = vadd.f32 0.0, %v390
        %v392 = vpop.f32.mrb[0].mxu0
        %v393 = vpop.f32.mrb[0].mxu0
        %v394 = vadd.f32 0.0, %v393
        %v395 = vpop.f32.mrb[0].mxu0
        %396 = vmatprep.mubr.bf16.mxu0 0
        %397 = vmatmul.mubr.bf16.gmra.mrb[0].mxu0 %v221
        %v398 = vpop.f32.mrb[0].mxu0
        %v399 = vadd.f32 0.0, %v398
        %v400 = vpop.f32.mrb[0].mxu0
        %v401 = vpop.f32.mrb[0].mxu0
        %v402 = vadd.f32 0.0, %v401
        %v403 = vpop.f32.mrb[0].mxu0
        %404 = vmatprep.mubr.bf16.mxu0 0
        %405 = vmatmul.mubr.bf16.gmra.mrb[0].mxu0 %v222
        %v406 = vpop.f32.mrb[0].mxu0
        %v407 = vadd.f32 0.0, %v406
        %v408 = vpop.f32.mrb[0].mxu0
        %v409 = vpop.f32.mrb[0].mxu0
        %v410 = vadd.f32 0.0, %v409
        %v411 = vpop.f32.mrb[0].mxu0
        %412 = vmatprep.mubr.bf16.mxu0 0
        %413 = vmatmul.mubr.bf16.gmra.mrb[0].mxu0 %v223
        %v414 = vpop.f32.mrb[0].mxu0
        %v415 = vadd.f32 0.0, %v414
        %v416 = vpop.f32.mrb[0].mxu0
        %v417 = vpop.f32.mrb[0].mxu0
        %v418 = vadd.f32 0.0, %v417
        %v419 = vpop.f32.mrb[0].mxu0
        %420 = vmatprep.mubr.bf16.mxu0 0
        %421 = vmatmul.mubr.bf16.gmra.mrb[0].mxu0 %v224
        %v422 = vpop.f32.mrb[0].mxu0
        %v423 = vadd.f32 0.0, %v422
        %v424 = vpop.f32.mrb[0].mxu0
        %v425 = vpop.f32.mrb[0].mxu0
        %v426 = vadd.f32 0.0, %v425
        %v427 = vpop.f32.mrb[0].mxu0
        %428 = vmatprep.mubr.bf16.mxu0 0
        %429 = vmatmul.mubr.bf16.gmra.mrb[0].mxu0 %v225
        %v430 = vpop.f32.mrb[0].mxu0
        %v431 = vadd.f32 0.0, %v430
        %v432 = vpop.f32.mrb[0].mxu0
        %v433 = vpop.f32.mrb[0].mxu0
        %v434 = vadd.f32 0.0, %v433
        %v435 = vpop.f32.mrb[0].mxu0
        %436 = vmatprep.mubr.bf16.mxu0 0
        %437 = vmatmul.mubr.bf16.gmra.mrb[0].mxu0 %v226
        %v438 = vpop.f32.mrb[0].mxu0
        %v439 = vadd.f32 0.0, %v438
        %v440 = vpop.f32.mrb[0].mxu0
        %v441 = vpop.f32.mrb[0].mxu0
        %v442 = vadd.f32 0.0, %v441
        %v443 = vpop.f32.mrb[0].mxu0
        %444 = vmatprep.mubr.bf16.mxu0 0
        %445 = vmatmul.mubr.bf16.gmra.mrb[0].mxu0 %v227
        %v446 = vpop.f32.mrb[0].mxu0
        %v447 = vadd.f32 0.0, %v446
        %v448 = vpop.f32.mrb[0].mxu0
        %v449 = vpop.f32.mrb[0].mxu0
        %v450 = vadd.f32 0.0, %v449
        %v451 = vpop.f32.mrb[0].mxu0
        %452 = vdwg.mxu0
        %v453 = vpack.c.bf16 %v330, %v327
        %v454 = vpack.c.bf16 %v338, %v335
        %v455 = vpack.c.bf16 %v346, %v343
        %v456 = vpack.c.bf16 %v354, %v351
        %v457 = vpack.c.bf16 %v362, %v359
        %v458 = vpack.c.bf16 %v370, %v367
        %v459 = vpack.c.bf16 %v378, %v375
        %v460 = vpack.c.bf16 %v386, %v383
        %v461 = vpack.c.bf16 %v394, %v391
        %v462 = vpack.c.bf16 %v402, %v399
        %v463 = vpack.c.bf16 %v410, %v407
        %v464 = vpack.c.bf16 %v418, %v415
        %v465 = vpack.c.bf16 %v426, %v423
        %v466 = vpack.c.bf16 %v434, %v431
        %v467 = vpack.c.bf16 %v442, %v439
        %v468 = vpack.c.bf16 %v450, %v447
        %v485 = vunpack.c.l.b16 %v453
        %v486 = vunpack.c.h.b16 %v453
        %v487 = vunpack.c.l.b16 %v454
        %v488 = vunpack.c.h.b16 %v454
        %v489 = vunpack.c.l.b16 %v455
        %v490 = vunpack.c.h.b16 %v455
        %v491 = vunpack.c.l.b16 %v456
        %v492 = vunpack.c.h.b16 %v456
        %v493 = vunpack.c.l.b16 %v457
        %v494 = vunpack.c.h.b16 %v457
        %v495 = vunpack.c.l.b16 %v458
        %v496 = vunpack.c.h.b16 %v458
        %v497 = vunpack.c.l.b16 %v459
        %v498 = vunpack.c.h.b16 %v459
        %v499 = vunpack.c.l.b16 %v460
        %v500 = vunpack.c.h.b16 %v460
        %v501 = vunpack.c.l.b16 %v461
        %v502 = vunpack.c.h.b16 %v461
        %v503 = vunpack.c.l.b16 %v462
        %v504 = vunpack.c.h.b16 %v462
        %v505 = vunpack.c.l.b16 %v463
        %v506 = vunpack.c.h.b16 %v463
        %v507 = vunpack.c.l.b16 %v464
        %v508 = vunpack.c.h.b16 %v464
        %v509 = vunpack.c.l.b16 %v465
        %v510 = vunpack.c.h.b16 %v465
        %v511 = vunpack.c.l.b16 %v466
        %v512 = vunpack.c.h.b16 %v466
        %v513 = vunpack.c.l.b16 %v467
        %v514 = vunpack.c.h.b16 %v467
        %v515 = vunpack.c.l.b16 %v468
        %v516 = vunpack.c.h.b16 %v468
        %v517 = vpack.c.b16 %v485, %v485
        %v518 = vpack.c.b16 %v486, %v486
        %v519 = vpack.c.b16 %v487, %v487
        %v520 = vpack.c.b16 %v488, %v488
        %v521 = vpack.c.b16 %v489, %v489
        %v522 = vpack.c.b16 %v490, %v490
        %v523 = vpack.c.b16 %v491, %v491
        %v524 = vpack.c.b16 %v492, %v492
        %v525 = vpack.c.b16 %v493, %v493
        %v526 = vpack.c.b16 %v494, %v494
        %v527 = vpack.c.b16 %v495, %v495
        %v528 = vpack.c.b16 %v496, %v496
        %v529 = vpack.c.b16 %v497, %v497
        %v530 = vpack.c.b16 %v498, %v498
        %v531 = vpack.c.b16 %v499, %v499
        %v532 = vpack.c.b16 %v500, %v500
        %v533 = vpack.c.b16 %v501, %v501
        %v534 = vpack.c.b16 %v502, %v502
        %v535 = vpack.c.b16 %v503, %v503
        %v536 = vpack.c.b16 %v504, %v504
        %v537 = vpack.c.b16 %v505, %v505
        %v538 = vpack.c.b16 %v506, %v506
        %v539 = vpack.c.b16 %v507, %v507
        %v540 = vpack.c.b16 %v508, %v508
        %v541 = vpack.c.b16 %v509, %v509
        %v542 = vpack.c.b16 %v510, %v510
        %v543 = vpack.c.b16 %v511, %v511
        %v544 = vpack.c.b16 %v512, %v512
        %v545 = vpack.c.b16 %v513, %v513
        %v546 = vpack.c.b16 %v514, %v514
        %v547 = vpack.c.b16 %v515, %v515
        %v548 = vpack.c.b16 %v516, %v516
        %581 = vst [vmem:[%s176] sm:$0xf] %v517
        %582 = vst [vmem:[%s176 + $0x4] sm:$0xf] %v518
        %583 = vst [vmem:[%s176 + $0x8] sm:$0xf] %v519
        %584 = vst [vmem:[%s176 + $0xc] sm:$0xf] %v520
        %585 = vst [vmem:[%s176 + $0x10] sm:$0xf] %v521
        %586 = vst [vmem:[%s176 + $0x14] sm:$0xf] %v522
        %587 = vst [vmem:[%s176 + $0x18] sm:$0xf] %v523
        %588 = vst [vmem:[%s176 + $0x1c] sm:$0xf] %v524
        %589 = vst [vmem:[%s176 + $0x20] sm:$0xf] %v525
        %590 = vst [vmem:[%s176 + $0x24] sm:$0xf] %v526
        %591 = vst [vmem:[%s176 + $0x28] sm:$0xf] %v527
        %592 = vst [vmem:[%s176 + $0x2c] sm:$0xf] %v528
        %593 = vst [vmem:[%s176 + $0x30] sm:$0xf] %v529
        %594 = vst [vmem:[%s176 + $0x34] sm:$0xf] %v530
        %595 = vst [vmem:[%s176 + $0x38] sm:$0xf] %v531
        %596 = vst [vmem:[%s176 + $0x3c] sm:$0xf] %v532
        %597 = vst [vmem:[%s176 + $0x40] sm:$0xf] %v533
        %598 = vst [vmem:[%s176 + $0x44] sm:$0xf] %v534
        %599 = vst [vmem:[%s176 + $0x48] sm:$0xf] %v535
        %600 = vst [vmem:[%s176 + $0x4c] sm:$0xf] %v536
        %601 = vst [vmem:[%s176 + $0x50] sm:$0xf] %v537
        %602 = vst [vmem:[%s176 + $0x54] sm:$0xf] %v538
        %603 = vst [vmem:[%s176 + $0x58] sm:$0xf] %v539
        %604 = vst [vmem:[%s176 + $0x5c] sm:$0xf] %v540
        %605 = vst [vmem:[%s176 + $0x60] sm:$0xf] %v541
        %606 = vst [vmem:[%s176 + $0x64] sm:$0xf] %v542
        %607 = vst [vmem:[%s176 + $0x68] sm:$0xf] %v543
        %608 = vst [vmem:[%s176 + $0x6c] sm:$0xf] %v544
        %609 = vst [vmem:[%s176 + $0x70] sm:$0xf] %v545
        %610 = vst [vmem:[%s176 + $0x74] sm:$0xf] %v546
        %611 = vst [vmem:[%s176 + $0x78] sm:$0xf] %v547
        %612 = vst [vmem:[%s176 + $0x7c] sm:$0xf] %v548
        %s613 = sand.u32 %s75, 1
        %s614 = scalar_lea.sflag [#allocation4], %s613
        %s615 = sand.u32 %s75, 1
        %s616 = smul.addr %s615, 128
        %s617 = scalar_lea.vmem [#allocation7], %s616
        // Predicated region
        $region37: #{tpu_custom_call.1} parent=27 // pred_check
          %p618 = pneg %p85
        $region38: #{tpu_custom_call.1} parent=27 // pred_check_branch
          %620 = sbr.rel (%p618) target = $region40
        $region39: #{tpu_custom_call.1} parent=27 // pred_region
          %s621 = smul.u32 32, %s20
          %s623 = ssub.s32 2048, 2048
          %624 = vsyncadd %s614, %s623
          %s625 = smul.addr %s621, 64
          %s626 = scalar_lea.hbm %s2, %s625
          %s627 = sshll.u32 %s617, 4
          %s628 = int_to_ptr.vmem [resolvable:$true] %s627
          %633 = dma.vmem_to_hbm [thread:$0]  %s628, 2048, %s626, %s614, 64, 64, 4
        $region40: #{tpu_custom_call.1} parent=27 // pred_fallthru
          _
      $region28: #{tpu_custom_call.1} parent=5 // pred_fallthru
        _
      %p634 = scmp.le.s32.totalorder 2, %s15
      // Predicated region
      $region41: #{tpu_custom_call.1} parent=5 // pred_check
        %p635 = pneg %p634
      $region42: #{tpu_custom_call.1} parent=5 // pred_check_branch
        %637 = sbr.rel (%p635) target = $region44
      $region43: #{tpu_custom_call.1} parent=5 // pred_region
        %s638 = ssub.s32 %s15, 2
        // Predicated region
        $region45: #{tpu_custom_call.1} parent=43 // pred_check
          %p639 = pneg %p91
        $region46: #{tpu_custom_call.1} parent=43 // pred_check_branch
          %641 = sbr.rel (%p639) target = $region48
        $region47: #{tpu_custom_call.1} parent=43 // pred_region
          %s642 = sand.u32 %s76, 1
          %s643 = scalar_lea.sflag [#allocation4], %s642
          %s644 = sand.u32 %s76, 1
          %s645 = smul.addr %s644, 128
          %s646 = scalar_lea.vmem [#allocation7], %s645
          %647 = dma.done %s643, 2048
        $region48: #{tpu_custom_call.1} parent=43 // pred_fallthru
          _
      $region44: #{tpu_custom_call.1} parent=5 // pred_fallthru
        _
    $region6: #{tpu_custom_call.1} parent=1 // loop_footer
      %s19 = sadd.s32 1, %s15
    $region7: #{tpu_custom_call.1} parent=1 // loop_footer_branch
      %14 = sbr.rel target = $region3
    $region8: #{tpu_custom_call.1} parent=1 // loop_exit
      _
    %648 = vsyncpa [#allocation3], 1
    %s649 = scalar_lea.sflag [#allocation3], 1
    %650 = vsyncpa %s649, 1
    %651 = vsyncpa [#allocation6], 1
    %652 = vsyncpa [#allocation4], 1
    %s653 = scalar_lea.sflag [#allocation4], 1
    %654 = vsyncpa %s653, 1

</llo_original>
